<compile_context>
chip_gen: v7x
topology: tpu7x:2x2x1
jax: 0.10.0
libtpu: 0.0.40
codegen_flags: <defaults>
</compile_context>

<pallas_src>
import functools

import jax
import jax.numpy as jnp
import numpy as np
from jax.experimental import pallas as pl
from jax.experimental.pallas import tpu as pltpu


def _round_up(x, m):
    return ((x + m - 1) // m) * m


def _cdiv(a, b):
    return -(-a // b)


# ----------------------------------------------------------------------------
# Kernel
# ----------------------------------------------------------------------------
def _sac_actor_kernel(n_hidden, log_std_min, log_std_max, a_pad, *refs):
    """One batch tile of the SAC actor forward.

    refs layout:
      refs[0]                      : state tile        [tm, input_dim]
      refs[1 + 2*i], refs[2 + 2*i] : hidden W_i [K,H], b_i [1,H]   (i < n_hidden)
      next 2 refs                  : fused head W [H, 2*a_pad], b [1, 2*a_pad]
                                     (cols [0:A) = mean, [a_pad:a_pad+A) = log_std)
      last ref                     : fused output slab [tm, 2*a_pad]
    """
    x_ref = refs[0]
    n_w = 2 * n_hidden + 2
    w_refs = refs[1 : 1 + n_w]
    out_ref = refs[1 + n_w]

    h = x_ref[...].astype(jnp.float32)

    # shared_net: (Linear -> ReLU) * n_hidden
    for i in range(n_hidden):
        w = w_refs[2 * i][...]
        b = w_refs[2 * i + 1][...]  # (1, H): broadcasts along sublanes for free
        h = jnp.dot(h, w, preferred_element_type=jnp.float32) + b
        h = jnp.maximum(h, 0.0)

    # fused heads: one matmul, lane-aligned split at a_pad (multiple of 128)
    w_heads = w_refs[2 * n_hidden][...]
    b_heads = w_refs[2 * n_hidden + 1][...]
    heads = jnp.dot(h, w_heads, preferred_element_type=jnp.float32) + b_heads

    # Clamp only the log_std half (lanes >= a_pad) with a lane mask, then do a
    # single full-width lane-dense store (one vst stream, no sub-slab stores).
    col = jax.lax.broadcasted_iota(jnp.int32, heads.shape, dimension=1)
    clipped = jnp.clip(heads, log_std_min, log_std_max)
    out_ref[...] = jnp.where(col < a_pad, heads, clipped).astype(out_ref.dtype)


# ----------------------------------------------------------------------------
# Parameter construction (deterministic, xavier_uniform like PyTorch init)
# ----------------------------------------------------------------------------
def xavier_uniform(key, fan_in, fan_out, dtype=jnp.float32):
    limit = float(np.sqrt(6.0 / (fan_in + fan_out)))
    return jax.random.uniform(
        key, (fan_in, fan_out), dtype=dtype, minval=-limit, maxval=limit
    )


def init_sac_actor_params(key, input_dim, hidden_dims, action_dim):
    """Flat list [W0, b0, ..., W_mean, b_mean, W_ls, b_ls], weights (in, out)."""
    params = []
    prev = input_dim
    keys = jax.random.split(key, len(hidden_dims) + 2)
    for i, h in enumerate(hidden_dims):
        params += [xavier_uniform(keys[i], prev, h), jnp.zeros((h,), jnp.float32)]
        prev = h
    params += [xavier_uniform(keys[-2], prev, action_dim),
               jnp.zeros((action_dim,), jnp.float32)]
    params += [xavier_uniform(keys[-1], prev, action_dim),
               jnp.zeros((action_dim,), jnp.float32)]
    return params


# ----------------------------------------------------------------------------
# Padded / fused parameter packing (zero padding preserves semantics)
# ----------------------------------------------------------------------------
def _pack_params(params, input_dim, hidden_dims, action_dim):
    n_hidden = len(hidden_dims)
    # NOTE (v6e/v7x): for hidden dims >= 512 a 256 lane multiple maps slightly
    # better onto the 2x256x256 MXU; at these sizes 128 is fine everywhere.
    h_pads = [_round_up(h, 128) for h in hidden_dims]
    a_pad = _round_up(max(action_dim, 1), 128)

    packed = []
    # W0 keeps the REAL input_dim rows -> no lane-padding copy of x needed.
    prev_real, prev_pad = input_dim, input_dim
    for i, h in enumerate(hidden_dims):
        w = params[2 * i].astype(jnp.float32)
        b = params[2 * i + 1].astype(jnp.float32)
        hp = h_pads[i]
        w_p = jnp.zeros((prev_pad, hp), jnp.float32).at[:prev_real, :h].set(w)
        b_p = jnp.zeros((1, hp), jnp.float32).at[0, :h].set(b)
        packed += [w_p, b_p]
        prev_real, prev_pad = h, hp

    w_mean = params[2 * n_hidden].astype(jnp.float32)
    b_mean = params[2 * n_hidden + 1].astype(jnp.float32)
    w_ls = params[2 * n_hidden + 2].astype(jnp.float32)
    b_ls = params[2 * n_hidden + 3].astype(jnp.float32)

    w_h = jnp.zeros((prev_pad, 2 * a_pad), jnp.float32)
    w_h = w_h.at[:prev_real, :action_dim].set(w_mean)
    w_h = w_h.at[:prev_real, a_pad:a_pad + action_dim].set(w_ls)
    b_h = jnp.zeros((1, 2 * a_pad), jnp.float32)
    b_h = b_h.at[0, :action_dim].set(b_mean)
    b_h = b_h.at[0, a_pad:a_pad + action_dim].set(b_ls)
    packed += [w_h, b_h]
    return packed, h_pads, a_pad


def _vmem_capacity_bytes():
    """Per-TensorCore VMEM capacity; generation-aware with a safe fallback."""
    try:
        info = pltpu.get_tpu_info()
        cap = getattr(info, "vmem_capacity_bytes", None)
        if cap:
            return int(cap)
    except Exception:
        pass
    return 128 << 20


# ----------------------------------------------------------------------------
# Wrapper
# ----------------------------------------------------------------------------
def sac_actor_forward(
    state, params, hidden_dims, action_dim, log_std_min=-20.0, log_std_max=2.0
):
    """Forward pass.  state: [B, ...] -> (mean [B, A], log_std [B, A])."""
    B = state.shape[0]
    if state.ndim > 2:
        # same as torch view(B, -1) on contiguous NCHW (free reshape)
        state = state.reshape(B, -1)
    state = state.astype(jnp.float32)
    input_dim = state.shape[1]
    n_hidden = len(hidden_dims)

    packed, h_pads, a_pad = _pack_params(params, input_dim, hidden_dims, action_dim)
    weight_bytes = sum(int(np.prod(p.shape)) * 4 for p in packed)

    # --- VMEM budget (generation aware: 64 MiB/TC on v7x, 128 MiB v5e/v6e) ---
    cap = _vmem_capacity_bytes()
    budget = int(min(max(cap - (24 << 20), 16 << 20), 100 << 20))

    # --- Batch tile: VMEM-budget driven, capped at 512 rows ------------------
    # per-row bytes: double-buffered x tile + double-buffered output slab +
    # rough bound on in-kernel intermediates (hidden activations + heads).
    per_row = 4 * (2 * input_dim + 2 * (2 * a_pad) + sum(h_pads) + 2 * a_pad)
    tm_by_vmem = (budget - weight_bytes - (4 << 20)) // max(per_row, 1)
    tm_cap = int(max(8, min(512, (tm_by_vmem // 8) * 8)))

    n_steps = max(1, _cdiv(B, tm_cap))
    if B >= 256 and n_steps < 2:
        n_steps = 2               # let both v7x TensorCores get a grid step
    if n_steps > 1 and n_steps % 2:
        n_steps += 1              # even step count -> balanced megacore split
    tm = _round_up(_cdiv(B, n_steps), 8)
    b_pad = n_steps * tm

    # Only pad batch rows (cheap, and skipped entirely when B already fits).
    x = state if b_pad == B else jnp.pad(state, ((0, b_pad - B), (0, 0)))

    kernel = functools.partial(
        _sac_actor_kernel, n_hidden, float(log_std_min), float(log_std_max), a_pad
    )

    # Cost estimate: matmul flops + dominant HBM traffic (x, weights, output).
    mm = 0
    prev = input_dim
    for hp in h_pads:
        mm += prev * hp
        prev = hp
    mm += prev * 2 * a_pad
    cost = pl.CostEstimate(
        flops=int(2 * b_pad * mm),
        transcendentals=0,
        bytes_accessed=int(4 * (b_pad * input_dim + b_pad * 2 * a_pad) + weight_bytes),
    )

    out_shape = jax.ShapeDtypeStruct((b_pad, 2 * a_pad), jnp.float32)
    out_specs = pl.BlockSpec((tm, 2 * a_pad), lambda i: (i, 0))

    def _run(single_buffer_weights):
        # Resident weights are DMA'd once; single-buffer them when they are
        # big enough that default double-buffering would waste real VMEM.
        wf = weight_bytes * (1 if single_buffer_weights else 2)
        est = (wf + 2 * tm * input_dim * 4 + 2 * tm * 2 * a_pad * 4
               + tm * (sum(h_pads) + 2 * a_pad) * 4 + (4 << 20))
        vmem_limit = int(min(max(est, 16 << 20), budget))

        in_specs = [pl.BlockSpec((tm, input_dim), lambda i: (i, 0))]
        for p in packed:
            if single_buffer_weights:
                in_specs.append(
                    pl.BlockSpec(p.shape, lambda i: (0, 0),
                                 pipeline_mode=pl.Buffered(1)))
            else:
                in_specs.append(pl.BlockSpec(p.shape, lambda i: (0, 0)))

        fn = pl.pallas_call(
            kernel,
            out_shape=out_shape,
            grid=(n_steps,),
            in_specs=in_specs,
            out_specs=out_specs,
            compiler_params=pltpu.CompilerParams(
                dimension_semantics=("parallel",),
                vmem_limit_bytes=vmem_limit,
            ),
            cost_estimate=cost,
        )
        return jax.block_until_ready(fn(x, *packed))

    want_single_buffer = weight_bytes > (4 << 20)
    if want_single_buffer:
        try:
            out = _run(True)
        except Exception:
            out = _run(False)
    else:
        out = _run(False)

    mean = out[:B, :action_dim]
    log_std = out[:B, a_pad:a_pad + action_dim]
    return mean, log_std


# ----------------------------------------------------------------------------
# Pure-JAX reference for correctness check
# ----------------------------------------------------------------------------
def sac_actor_reference(state, params, hidden_dims, log_std_min, log_std_max):
    B = state.shape[0]
    x = state.reshape(B, -1).astype(jnp.float32)
    n_hidden = len(hidden_dims)
    for i in range(n_hidden):
        x = jnp.maximum(x @ params[2 * i] + params[2 * i + 1], 0.0)
    mean = x @ params[2 * n_hidden] + params[2 * n_hidden + 1]
    log_std = x @ params[2 * n_hidden + 2] + params[2 * n_hidden + 3]
    log_std = jnp.clip(log_std, log_std_min, log_std_max)
    return mean, log_std


# TODO(synk): SACActorNetwork.sample() (Normal rsample + tanh squash + log_prob)
# is a separate stochastic method, not part of forward(); not implemented here.

if __name__ == "__main__":
    log_std_min, log_std_max = -20.0, 2.0
    key = jax.random.PRNGKey(0)

    # --- Test 1: image obs, tiny batch (spec shapes) -----------------------
    obs_shape = (4, 16, 16)          # input_dim = 1024
    hidden_dims = (32, 32)
    action_dim = 8
    batch = 2

    k_x, k_p, k_x2, k_p2 = jax.random.split(key, 4)
    x = jax.random.normal(k_x, (batch,) + obs_shape, dtype=jnp.float32)
    input_dim = int(np.prod(obs_shape))
    params = init_sac_actor_params(k_p, input_dim, hidden_dims, action_dim)

    mean, log_std = sac_actor_forward(
        x, params, hidden_dims, action_dim, log_std_min, log_std_max
    )
    jax.block_until_ready((mean, log_std))

    ref_mean, ref_log_std = sac_actor_reference(
        x, params, hidden_dims, log_std_min, log_std_max
    )
    np.testing.assert_allclose(np.asarray(mean), np.asarray(ref_mean),
                               rtol=1e-5, atol=1e-5)
    np.testing.assert_allclose(np.asarray(log_std), np.asarray(ref_log_std),
                               rtol=1e-5, atol=1e-5)
    assert mean.shape == (batch, action_dim)
    assert log_std.shape == (batch, action_dim)
    assert float(jnp.max(log_std)) <= log_std_max + 1e-6
    assert float(jnp.min(log_std)) >= log_std_min - 1e-6

    # --- Test 2: 1-D obs, non-trivial batch (exercises the batch grid) -----
    obs_shape2 = (24,)
    hidden_dims2 = (32, 32)
    action_dim2 = 6
    batch2 = 200

    x2 = jax.random.normal(k_x2, (batch2,) + obs_shape2, dtype=jnp.float32)
    params2 = init_sac_actor_params(k_p2, obs_shape2[0], hidden_dims2, action_dim2)

    mean2, log_std2 = sac_actor_forward(
        x2, params2, hidden_dims2, action_dim2, log_std_min, log_std_max
    )
    jax.block_until_ready((mean2, log_std2))

    ref_mean2, ref_log_std2 = sac_actor_reference(
        x2, params2, hidden_dims2, log_std_min, log_std_max
    )
    np.testing.assert_allclose(np.asarray(mean2), np.asarray(ref_mean2),
                               rtol=1e-5, atol=1e-5)
    np.testing.assert_allclose(np.asarray(log_std2), np.asarray(ref_log_std2),
                               rtol=1e-5, atol=1e-5)
    assert mean2.shape == (batch2, action_dim2)
    assert log_std2.shape == (batch2, action_dim2)

    # --- Test 3: larger batch exercising a multi-step (parallel) grid ------
    batch3 = 600
    x3 = jax.random.normal(jax.random.PRNGKey(3), (batch3,) + obs_shape2,
                           dtype=jnp.float32)
    mean3, log_std3 = sac_actor_forward(
        x3, params2, hidden_dims2, action_dim2, log_std_min, log_std_max
    )
    jax.block_until_ready((mean3, log_std3))
    ref_mean3, ref_log_std3 = sac_actor_reference(
        x3, params2, hidden_dims2, log_std_min, log_std_max
    )
    np.testing.assert_allclose(np.asarray(mean3), np.asarray(ref_mean3),
                               rtol=1e-5, atol=1e-5)
    np.testing.assert_allclose(np.asarray(log_std3), np.asarray(ref_log_std3),
                               rtol=1e-5, atol=1e-5)

    print("KERNEL_OK")
</pallas_src>

<mosaic_0001>
module attributes {stable_mosaic.version = 11 : i64} {
  func.func @_sac_actor_kernel(%arg0: i32, %arg1: memref<8x1024xf32, #tpu.memory_space<vmem>>, %arg2: memref<1024x128xf32, #tpu.memory_space<vmem>>, %arg3: memref<1x128xf32, #tpu.memory_space<vmem>>, %arg4: memref<128x128xf32, #tpu.memory_space<vmem>>, %arg5: memref<1x128xf32, #tpu.memory_space<vmem>>, %arg6: memref<128x256xf32, #tpu.memory_space<vmem>>, %arg7: memref<1x256xf32, #tpu.memory_space<vmem>>, %arg8: memref<8x256xf32, #tpu.memory_space<vmem>>) attributes {dimension_semantics = [#tpu.dimension_semantics<parallel>], iteration_bounds = array<i64: 1>, scalar_prefetch = 0 : i64, scratch_operands = 0 : i64, tpu.core_type = #tpu.core_type<tc>, window_params = [{transform_indices = @transform_0, window_bounds = array<i64: 8, 1024>}, {pipeline_mode = #tpu.pipeline_mode<synchronous>, transform_indices = @transform_1, window_bounds = array<i64: 1024, 128>}, {pipeline_mode = #tpu.pipeline_mode<synchronous>, transform_indices = @transform_2, window_bounds = array<i64: 1, 128>}, {pipeline_mode = #tpu.pipeline_mode<synchronous>, transform_indices = @transform_3, window_bounds = array<i64: 128, 128>}, {pipeline_mode = #tpu.pipeline_mode<synchronous>, transform_indices = @transform_4, window_bounds = array<i64: 1, 128>}, {pipeline_mode = #tpu.pipeline_mode<synchronous>, transform_indices = @transform_5, window_bounds = array<i64: 128, 256>}, {pipeline_mode = #tpu.pipeline_mode<synchronous>, transform_indices = @transform_6, window_bounds = array<i64: 1, 256>}, {transform_indices = @transform_7, window_bounds = array<i64: 8, 256>}]} {
    %c0 = arith.constant 0 : index
    %c0_0 = arith.constant 0 : index
    %0 = vector.load %arg1[%c0, %c0_0] : memref<8x1024xf32, #tpu.memory_space<vmem>>, vector<8x1024xf32>
    %c0_1 = arith.constant 0 : index
    %c0_2 = arith.constant 0 : index
    %1 = vector.load %arg2[%c0_1, %c0_2] : memref<1024x128xf32, #tpu.memory_space<vmem>>, vector<1024x128xf32>
    %c0_3 = arith.constant 0 : index
    %c0_4 = arith.constant 0 : index
    %2 = vector.load %arg3[%c0_3, %c0_4] : memref<1x128xf32, #tpu.memory_space<vmem>>, vector<1x128xf32>
    %cst = arith.constant dense<0.000000e+00> : vector<8x128xf32>
    %3 = tpu.matmul %0, %1, %cst {dimension_numbers = #tpu.dot_dimension_numbers<[1], [0], [0], [1], [0, 0, 1, 1], [], []>} : vector<8x1024xf32>, vector<1024x128xf32>, vector<8x128xf32> -> vector<8x128xf32>
    %4 = vector.broadcast %2 : vector<1x128xf32> to vector<8x128xf32>
    %5 = arith.addf %3, %4 : vector<8x128xf32>
    %cst_5 = arith.constant 0.000000e+00 : f32
    %6 = vector.broadcast %cst_5 : f32 to vector<8x128xf32>
    %7 = arith.maximumf %5, %6 : vector<8x128xf32>
    %c0_6 = arith.constant 0 : index
    %c0_7 = arith.constant 0 : index
    %8 = vector.load %arg4[%c0_6, %c0_7] : memref<128x128xf32, #tpu.memory_space<vmem>>, vector<128x128xf32>
    %c0_8 = arith.constant 0 : index
    %c0_9 = arith.constant 0 : index
    %9 = vector.load %arg5[%c0_8, %c0_9] : memref<1x128xf32, #tpu.memory_space<vmem>>, vector<1x128xf32>
    %cst_10 = arith.constant dense<0.000000e+00> : vector<8x128xf32>
    %10 = tpu.matmul %7, %8, %cst_10 {dimension_numbers = #tpu.dot_dimension_numbers<[1], [0], [0], [1], [0, 0, 1, 1], [], []>} : vector<8x128xf32>, vector<128x128xf32>, vector<8x128xf32> -> vector<8x128xf32>
    %11 = vector.broadcast %9 : vector<1x128xf32> to vector<8x128xf32>
    %12 = arith.addf %10, %11 : vector<8x128xf32>
    %cst_11 = arith.constant 0.000000e+00 : f32
    %13 = vector.broadcast %cst_11 : f32 to vector<8x128xf32>
    %14 = arith.maximumf %12, %13 : vector<8x128xf32>
    %c0_12 = arith.constant 0 : index
    %c0_13 = arith.constant 0 : index
    %15 = vector.load %arg6[%c0_12, %c0_13] : memref<128x256xf32, #tpu.memory_space<vmem>>, vector<128x256xf32>
    %c0_14 = arith.constant 0 : index
    %c0_15 = arith.constant 0 : index
    %16 = vector.load %arg7[%c0_14, %c0_15] : memref<1x256xf32, #tpu.memory_space<vmem>>, vector<1x256xf32>
    %cst_16 = arith.constant dense<0.000000e+00> : vector<8x256xf32>
    %17 = tpu.matmul %14, %15, %cst_16 {dimension_numbers = #tpu.dot_dimension_numbers<[1], [0], [0], [1], [0, 0, 1, 1], [], []>} : vector<8x128xf32>, vector<128x256xf32>, vector<8x256xf32> -> vector<8x256xf32>
    %18 = vector.broadcast %16 : vector<1x256xf32> to vector<8x256xf32>
    %19 = arith.addf %17, %18 : vector<8x256xf32>
    %20 = tpu.iota {dimensions = array<i32: 1>} : vector<8x256xi32>
    %cst_17 = arith.constant -2.000000e+01 : f32
    %cst_18 = arith.constant 2.000000e+00 : f32
    %21 = vector.broadcast %cst_17 : f32 to vector<8x256xf32>
    %22 = arith.maximumf %21, %19 : vector<8x256xf32>
    %23 = vector.broadcast %cst_18 : f32 to vector<8x256xf32>
    %24 = arith.minimumf %23, %22 : vector<8x256xf32>
    %c128_i32 = arith.constant 128 : i32
    %25 = vector.broadcast %c128_i32 : i32 to vector<8x256xi32>
    %26 = arith.cmpi slt, %20, %25 : vector<8x256xi32>
    %27 = arith.select %26, %19, %24 : vector<8x256xi1>, vector<8x256xf32>
    %c0_19 = arith.constant 0 : index
    %c0_20 = arith.constant 0 : index
    %28 = vector.load %arg8[%c0_19, %c0_20] : memref<8x256xf32, #tpu.memory_space<vmem>>, vector<8x256xf32>
    tpu.vector_store %arg8[%c0_19, %c0_20], %27 {strides = array<i32>} : memref<8x256xf32, #tpu.memory_space<vmem>>, vector<8x256xf32>,
    return
  }
  func.func @transform_0(%arg0: i32) -> (i32, i32) {
    %c0_i32 = arith.constant 0 : i32
    %c0_i32_0 = arith.constant 0 : i32
    return %arg0, %c0_i32 : i32, i32
  }
  func.func @transform_1(%arg0: i32) -> (i32, i32) {
    %c0_i32 = arith.constant 0 : i32
    %c0_i32_0 = arith.constant 0 : i32
    %c0_i32_1 = arith.constant 0 : i32
    return %c0_i32, %c0_i32_0 : i32, i32
  }
  func.func @transform_2(%arg0: i32) -> (i32, i32) {
    %c0_i32 = arith.constant 0 : i32
    %c0_i32_0 = arith.constant 0 : i32
    %c0_i32_1 = arith.constant 0 : i32
    return %c0_i32, %c0_i32_0 : i32, i32
  }
  func.func @transform_3(%arg0: i32) -> (i32, i32) {
    %c0_i32 = arith.constant 0 : i32
    %c0_i32_0 = arith.constant 0 : i32
    %c0_i32_1 = arith.constant 0 : i32
    return %c0_i32, %c0_i32_0 : i32, i32
  }
  func.func @transform_4(%arg0: i32) -> (i32, i32) {
    %c0_i32 = arith.constant 0 : i32
    %c0_i32_0 = arith.constant 0 : i32
    %c0_i32_1 = arith.constant 0 : i32
    return %c0_i32, %c0_i32_0 : i32, i32
  }
  func.func @transform_5(%arg0: i32) -> (i32, i32) {
    %c0_i32 = arith.constant 0 : i32
    %c0_i32_0 = arith.constant 0 : i32
    %c0_i32_1 = arith.constant 0 : i32
    return %c0_i32, %c0_i32_0 : i32, i32
  }
  func.func @transform_6(%arg0: i32) -> (i32, i32) {
    %c0_i32 = arith.constant 0 : i32
    %c0_i32_0 = arith.constant 0 : i32
    %c0_i32_1 = arith.constant 0 : i32
    return %c0_i32, %c0_i32_0 : i32, i32
  }
  func.func @transform_7(%arg0: i32) -> (i32, i32) {
    %c0_i32 = arith.constant 0 : i32
    %c0_i32_0 = arith.constant 0 : i32
    return %arg0, %c0_i32 : i32, i32
  }
}

</mosaic_0001>

<llo_original>
// kernel: tpu_custom_call.1
$region0: #{tpu_custom_call.1}
  #allocation0 [shape = 'u32[]', space=smem, size = 0x4, offset = 0x4, fixed_abs, tag = 'smem constant byte address 0x4 - core index']
  #allocation1 [shape = 'u32[144,128]{1,0:T(1,128)}', space=vmem, size = 0x12000, scoped, tag = 'internal scratch']
  %s0 = inlined_call_operand.hbm [shape: f32[8,1024], index: 0, kind: input, shape index: {}]
  %s1 = inlined_call_operand.hbm [shape: f32[1024,128], index: 1, kind: input, shape index: {}]
  %s2 = inlined_call_operand.vmem [shape: f32[1,128], index: 2, kind: input, shape index: {}]
  %s3 = inlined_call_operand.hbm [shape: f32[128,128], index: 3, kind: input, shape index: {}]
  %s4 = inlined_call_operand.vmem [shape: f32[1,128], index: 4, kind: input, shape index: {}]
  %s5 = inlined_call_operand.hbm [shape: f32[128,256], index: 5, kind: input, shape index: {}]
  %s6 = inlined_call_operand.vmem [shape: f32[1,256], index: 6, kind: input, shape index: {}]
  %s7 = inlined_call_operand.hbm [shape: f32[8,256], index: 7, kind: output, shape index: {}]
  %s8 = sld [smem:[#allocation0]]
  $region54: #{tpu_custom_call.1} parent=0
    _
  %s10 = ssub.s32 1, %s8
  %s11 = scalar_select 0, %s10, %s8
  $region1: #{tpu_custom_call.1} parent=0
    #allocation2 [shape = 'u8[32768]{0}', space=vmem, size = 0x8000, scoped, tag = 'input window, operand 0, single buffered']
    #allocation3 [shape = 's32[1]{0}', space=sflag, size = 0x4, scoped, tag = 'scoped memory for tpu_custom_call.1']
    #allocation4 [shape = 's32[1]{0}', space=sflag, size = 0x4, scoped, tag = 'scoped memory for tpu_custom_call.1']
    #allocation5 [shape = 'u8[524288]{0}', space=vmem, size = 0x80000, scoped, tag = 'input window, operand 1, single buffered']
    #allocation6 [shape = 's32[1]{0}', space=sflag, size = 0x4, scoped, tag = 'scoped memory for tpu_custom_call.1']
    #allocation7 [shape = 'u8[65536]{0}', space=vmem, size = 0x10000, scoped, tag = 'input window, operand 3, single buffered']
    #allocation8 [shape = 'u8[131072]{0}', space=vmem, size = 0x20000, scoped, tag = 'input window, operand 5, single buffered']
    #allocation9 [shape = 's32[1]{0}', space=sflag, size = 0x4, scoped, tag = 'scoped memory for tpu_custom_call.1']
    #allocation10 [shape = 'u8[8192]{0}', space=vmem, size = 0x2000, scoped, tag = 'output window, operand 0, single buffered']
    %12 = vsyncpa [#allocation3], 0
    %13 = vsyncpa [#allocation6], 0
    %14 = vsyncpa [#allocation9], 0
    %15 = vsyncpa [#allocation4], 0
    // Predicated region
    $region2: #{tpu_custom_call.1} parent=1 // pred_check
      _
    $region3: #{tpu_custom_call.1} parent=1 // pred_check_branch
      %17 = sbr.rel (0) target = $region5
    $region4: #{tpu_custom_call.1} parent=1 // pred_region
      %s19 = ssub.s32 1024, 1024
      %20 = vsyncadd [#allocation3], %s19
      %s22 = sshll.u32 [#allocation2], 4
      %s23 = int_to_ptr.vmem [resolvable:$true] %s22
      %25 = dma.hbm_to_vmem [thread:$0]  %s0, 1024, %s23, [#allocation3]
    $region5: #{tpu_custom_call.1} parent=1 // pred_fallthru
      _
    // Predicated region
    $region6: #{tpu_custom_call.1} parent=1 // pred_check
      _
    $region7: #{tpu_custom_call.1} parent=1 // pred_check_branch
      %27 = sbr.rel (0) target = $region9
    $region8: #{tpu_custom_call.1} parent=1 // pred_region
      %s29 = ssub.s32 16384, 16384
      %30 = vsyncadd [#allocation6], %s29
      %s31 = sshll.u32 [#allocation5], 4
      %s32 = int_to_ptr.vmem [resolvable:$true] %s31
      %37 = dma.hbm_to_vmem [thread:$0]  %s1, 16384, %s32, [#allocation6], 128, 128, 8
    $region9: #{tpu_custom_call.1} parent=1 // pred_fallthru
      _
    // Predicated region
    $region10: #{tpu_custom_call.1} parent=1 // pred_check
      _
    $region11: #{tpu_custom_call.1} parent=1 // pred_check_branch
      %39 = sbr.rel (0) target = $region13
    $region12: #{tpu_custom_call.1} parent=1 // pred_region
      _
    $region13: #{tpu_custom_call.1} parent=1 // pred_fallthru
      _
    // Predicated region
    $region14: #{tpu_custom_call.1} parent=1 // pred_check
      _
    $region15: #{tpu_custom_call.1} parent=1 // pred_check_branch
      %41 = sbr.rel (0) target = $region17
    $region16: #{tpu_custom_call.1} parent=1 // pred_region
      %s43 = ssub.s32 2048, 2048
      %44 = vsyncadd [#allocation6], %s43
      %s45 = sshll.u32 [#allocation7], 4
      %s46 = int_to_ptr.vmem [resolvable:$true] %s45
      %51 = dma.hbm_to_vmem [thread:$0]  %s3, 2048, %s46, [#allocation6], 128, 128, 8
    $region17: #{tpu_custom_call.1} parent=1 // pred_fallthru
      _
    // Predicated region
    $region18: #{tpu_custom_call.1} parent=1 // pred_check
      _
    $region19: #{tpu_custom_call.1} parent=1 // pred_check_branch
      %53 = sbr.rel (0) target = $region21
    $region20: #{tpu_custom_call.1} parent=1 // pred_region
      _
    $region21: #{tpu_custom_call.1} parent=1 // pred_fallthru
      _
    // Predicated region
    $region22: #{tpu_custom_call.1} parent=1 // pred_check
      _
    $region23: #{tpu_custom_call.1} parent=1 // pred_check_branch
      %55 = sbr.rel (0) target = $region25
    $region24: #{tpu_custom_call.1} parent=1 // pred_region
      %s57 = ssub.s32 4096, 4096
      %58 = vsyncadd [#allocation9], %s57
      %s59 = sshll.u32 [#allocation8], 4
      %s60 = int_to_ptr.vmem [resolvable:$true] %s59
      %65 = dma.hbm_to_vmem [thread:$0]  %s5, 4096, %s60, [#allocation9], 256, 256, 16
    $region25: #{tpu_custom_call.1} parent=1 // pred_fallthru
      _
    // Predicated region
    $region26: #{tpu_custom_call.1} parent=1 // pred_check
      _
    $region27: #{tpu_custom_call.1} parent=1 // pred_check_branch
      %67 = sbr.rel (0) target = $region29
    $region28: #{tpu_custom_call.1} parent=1 // pred_region
      _
    $region29: #{tpu_custom_call.1} parent=1 // pred_fallthru
      _
    // Predicated region
    $region30: #{tpu_custom_call.1} parent=1 // pred_check
      _
    $region31: #{tpu_custom_call.1} parent=1 // pred_check_branch
      %69 = sbr.rel (0) target = $region33
    $region32: #{tpu_custom_call.1} parent=1 // pred_region
      %70 = dma.done [#allocation3], 1024
    $region33: #{tpu_custom_call.1} parent=1 // pred_fallthru
      _
    // Predicated region
    $region34: #{tpu_custom_call.1} parent=1 // pred_check
      _
    $region35: #{tpu_custom_call.1} parent=1 // pred_check_branch
      %72 = sbr.rel (0) target = $region37
    $region36: #{tpu_custom_call.1} parent=1 // pred_region
      %73 = dma.done [#allocation6], 16384
    $region37: #{tpu_custom_call.1} parent=1 // pred_fallthru
      _
    // Predicated region
    $region38: #{tpu_custom_call.1} parent=1 // pred_check
      _
    $region39: #{tpu_custom_call.1} parent=1 // pred_check_branch
      %75 = sbr.rel (0) target = $region41
    $region40: #{tpu_custom_call.1} parent=1 // pred_region
      %76 = dma.done [#allocation6], 2048
    $region41: #{tpu_custom_call.1} parent=1 // pred_fallthru
      _
    // Predicated region
    $region42: #{tpu_custom_call.1} parent=1 // pred_check
      _
    $region43: #{tpu_custom_call.1} parent=1 // pred_check_branch
      %78 = sbr.rel (0) target = $region45
    $region44: #{tpu_custom_call.1} parent=1 // pred_region
      %79 = dma.done [#allocation9], 4096
    $region45: #{tpu_custom_call.1} parent=1 // pred_fallthru
      _
    %v80 = vld [vmem:[#allocation2] sm:$0xff]
    %v81 = vld [vmem:[#allocation2 + $0x8] sm:$0xff]
    %v82 = vld [vmem:[#allocation2 + $0x10] sm:$0xff]
    %v83 = vld [vmem:[#allocation2 + $0x18] sm:$0xff]
    %v84 = vld [vmem:[#allocation2 + $0x20] sm:$0xff]
    %v85 = vld [vmem:[#allocation2 + $0x28] sm:$0xff]
    %v86 = vld [vmem:[#allocation2 + $0x30] sm:$0xff]
    %v87 = vld [vmem:[#allocation2 + $0x38] sm:$0xff]
    %v88 = vld [vmem:[#allocation5] sm:$0xff]
    %v89 = vld [vmem:[#allocation5 + $0x8] sm:$0xff]
    %v90 = vld [vmem:[#allocation5 + $0x10] sm:$0xff]
    %v91 = vld [vmem:[#allocation5 + $0x18] sm:$0xff]
    %v92 = vld [vmem:[#allocation5 + $0x20] sm:$0xff]
    %v93 = vld [vmem:[#allocation5 + $0x28] sm:$0xff]
    %v94 = vld [vmem:[#allocation5 + $0x30] sm:$0xff]
    %v95 = vld [vmem:[#allocation5 + $0x38] sm:$0xff]
    %v96 = vld [vmem:[#allocation5 + $0x40] sm:$0xff]
    %v97 = vld [vmem:[#allocation5 + $0x48] sm:$0xff]
    %v98 = vld [vmem:[#allocation5 + $0x50] sm:$0xff]
    %v99 = vld [vmem:[#allocation5 + $0x58] sm:$0xff]
    %v100 = vld [vmem:[#allocation5 + $0x60] sm:$0xff]
    %v101 = vld [vmem:[#allocation5 + $0x68] sm:$0xff]
    %v102 = vld [vmem:[#allocation5 + $0x70] sm:$0xff]
    %v103 = vld [vmem:[#allocation5 + $0x78] sm:$0xff]
    %v104 = vld [vmem:[#allocation5 + $0x80] sm:$0xff]
    %v105 = vld [vmem:[#allocation5 + $0x88] sm:$0xff]
    %v106 = vld [vmem:[#allocation5 + $0x90] sm:$0xff]
    %v107 = vld [vmem:[#allocation5 + $0x98] sm:$0xff]
    %v108 = vld [vmem:[#allocation5 + $0xa0] sm:$0xff]
    %v109 = vld [vmem:[#allocation5 + $0xa8] sm:$0xff]
    %v110 = vld [vmem:[#allocation5 + $0xb0] sm:$0xff]
    %v111 = vld [vmem:[#allocation5 + $0xb8] sm:$0xff]
    %v112 = vld [vmem:[#allocation5 + $0xc0] sm:$0xff]
    %v113 = vld [vmem:[#allocation5 + $0xc8] sm:$0xff]
    %v114 = vld [vmem:[#allocation5 + $0xd0] sm:$0xff]
    %v115 = vld [vmem:[#allocation5 + $0xd8] sm:$0xff]
    %v116 = vld [vmem:[#allocation5 + $0xe0] sm:$0xff]
    %v117 = vld [vmem:[#allocation5 + $0xe8] sm:$0xff]
    %v118 = vld [vmem:[#allocation5 + $0xf0] sm:$0xff]
    %v119 = vld [vmem:[#allocation5 + $0xf8] sm:$0xff]
    %v120 = vld [vmem:[#allocation5 + $0x100] sm:$0xff]
    %v121 = vld [vmem:[#allocation5 + $0x108] sm:$0xff]
    %v122 = vld [vmem:[#allocation5 + $0x110] sm:$0xff]
    %v123 = vld [vmem:[#allocation5 + $0x118] sm:$0xff]
    %v124 = vld [vmem:[#allocation5 + $0x120] sm:$0xff]
    %v125 = vld [vmem:[#allocation5 + $0x128] sm:$0xff]
    %v126 = vld [vmem:[#allocation5 + $0x130] sm:$0xff]
    %v127 = vld [vmem:[#allocation5 + $0x138] sm:$0xff]
    %v128 = vld [vmem:[#allocation5 + $0x140] sm:$0xff]
    %v129 = vld [vmem:[#allocation5 + $0x148] sm:$0xff]
    %v130 = vld [vmem:[#allocation5 + $0x150] sm:$0xff]
    %v131 = vld [vmem:[#allocation5 + $0x158] sm:$0xff]
    %v132 = vld [vmem:[#allocation5 + $0x160] sm:$0xff]
    %v133 = vld [vmem:[#allocation5 + $0x168] sm:$0xff]
    %v134 = vld [vmem:[#allocation5 + $0x170] sm:$0xff]
    %v135 = vld [vmem:[#allocation5 + $0x178] sm:$0xff]
    %v136 = vld [vmem:[#allocation5 + $0x180] sm:$0xff]
    %v137 = vld [vmem:[#allocation5 + $0x188] sm:$0xff]
    %v138 = vld [vmem:[#allocation5 + $0x190] sm:$0xff]
    %v139 = vld [vmem:[#allocation5 + $0x198] sm:$0xff]
    %v140 = vld [vmem:[#allocation5 + $0x1a0] sm:$0xff]
    %v141 = vld [vmem:[#allocation5 + $0x1a8] sm:$0xff]
    %v142 = vld [vmem:[#allocation5 + $0x1b0] sm:$0xff]
    %v143 = vld [vmem:[#allocation5 + $0x1b8] sm:$0xff]
    %v144 = vld [vmem:[#allocation5 + $0x1c0] sm:$0xff]
    %v145 = vld [vmem:[#allocation5 + $0x1c8] sm:$0xff]
    %v146 = vld [vmem:[#allocation5 + $0x1d0] sm:$0xff]
    %v147 = vld [vmem:[#allocation5 + $0x1d8] sm:$0xff]
    %v148 = vld [vmem:[#allocation5 + $0x1e0] sm:$0xff]
    %v149 = vld [vmem:[#allocation5 + $0x1e8] sm:$0xff]
    %v150 = vld [vmem:[#allocation5 + $0x1f0] sm:$0xff]
    %v151 = vld [vmem:[#allocation5 + $0x1f8] sm:$0xff]
    %v152 = vld [vmem:[#allocation5 + $0x200] sm:$0xff]
    %v153 = vld [vmem:[#allocation5 + $0x208] sm:$0xff]
    %v154 = vld [vmem:[#allocation5 + $0x210] sm:$0xff]
    %v155 = vld [vmem:[#allocation5 + $0x218] sm:$0xff]
    %v156 = vld [vmem:[#allocation5 + $0x220] sm:$0xff]
    %v157 = vld [vmem:[#allocation5 + $0x228] sm:$0xff]
    %v158 = vld [vmem:[#allocation5 + $0x230] sm:$0xff]
    %v159 = vld [vmem:[#allocation5 + $0x238] sm:$0xff]
    %v160 = vld [vmem:[#allocation5 + $0x240] sm:$0xff]
    %v161 = vld [vmem:[#allocation5 + $0x248] sm:$0xff]
    %v162 = vld [vmem:[#allocation5 + $0x250] sm:$0xff]
    %v163 = vld [vmem:[#allocation5 + $0x258] sm:$0xff]
    %v164 = vld [vmem:[#allocation5 + $0x260] sm:$0xff]
    %v165 = vld [vmem:[#allocation5 + $0x268] sm:$0xff]
    %v166 = vld [vmem:[#allocation5 + $0x270] sm:$0xff]
    %v167 = vld [vmem:[#allocation5 + $0x278] sm:$0xff]
    %v168 = vld [vmem:[#allocation5 + $0x280] sm:$0xff]
    %v169 = vld [vmem:[#allocation5 + $0x288] sm:$0xff]
    %v170 = vld [vmem:[#allocation5 + $0x290] sm:$0xff]
    %v171 = vld [vmem:[#allocation5 + $0x298] sm:$0xff]
    %v172 = vld [vmem:[#allocation5 + $0x2a0] sm:$0xff]
    %v173 = vld [vmem:[#allocation5 + $0x2a8] sm:$0xff]
    %v174 = vld [vmem:[#allocation5 + $0x2b0] sm:$0xff]
    %v175 = vld [vmem:[#allocation5 + $0x2b8] sm:$0xff]
    %v176 = vld [vmem:[#allocation5 + $0x2c0] sm:$0xff]
    %v177 = vld [vmem:[#allocation5 + $0x2c8] sm:$0xff]
    %v178 = vld [vmem:[#allocation5 + $0x2d0] sm:$0xff]
    %v179 = vld [vmem:[#allocation5 + $0x2d8] sm:$0xff]
    %v180 = vld [vmem:[#allocation5 + $0x2e0] sm:$0xff]
    %v181 = vld [vmem:[#allocation5 + $0x2e8] sm:$0xff]
    %v182 = vld [vmem:[#allocation5 + $0x2f0] sm:$0xff]
    %v183 = vld [vmem:[#allocation5 + $0x2f8] sm:$0xff]
    %v184 = vld [vmem:[#allocation5 + $0x300] sm:$0xff]
    %v185 = vld [vmem:[#allocation5 + $0x308] sm:$0xff]
    %v186 = vld [vmem:[#allocation5 + $0x310] sm:$0xff]
    %v187 = vld [vmem:[#allocation5 + $0x318] sm:$0xff]
    %v188 = vld [vmem:[#allocation5 + $0x320] sm:$0xff]
    %v189 = vld [vmem:[#allocation5 + $0x328] sm:$0xff]
    %v190 = vld [vmem:[#allocation5 + $0x330] sm:$0xff]
    %v191 = vld [vmem:[#allocation5 + $0x338] sm:$0xff]
    %v192 = vld [vmem:[#allocation5 + $0x340] sm:$0xff]
    %v193 = vld [vmem:[#allocation5 + $0x348] sm:$0xff]
    %v194 = vld [vmem:[#allocation5 + $0x350] sm:$0xff]
    %v195 = vld [vmem:[#allocation5 + $0x358] sm:$0xff]
    %v196 = vld [vmem:[#allocation5 + $0x360] sm:$0xff]
    %v197 = vld [vmem:[#allocation5 + $0x368] sm:$0xff]
    %v198 = vld [vmem:[#allocation5 + $0x370] sm:$0xff]
    %v199 = vld [vmem:[#allocation5 + $0x378] sm:$0xff]
    %v200 = vld [vmem:[#allocation5 + $0x380] sm:$0xff]
    %v201 = vld [vmem:[#allocation5 + $0x388] sm:$0xff]
    %v202 = vld [vmem:[#allocation5 + $0x390] sm:$0xff]
    %v203 = vld [vmem:[#allocation5 + $0x398] sm:$0xff]
    %v204 = vld [vmem:[#allocation5 + $0x3a0] sm:$0xff]
    %v205 = vld [vmem:[#allocation5 + $0x3a8] sm:$0xff]
    %v206 = vld [vmem:[#allocation5 + $0x3b0] sm:$0xff]
    %v207 = vld [vmem:[#allocation5 + $0x3b8] sm:$0xff]
    %v208 = vld [vmem:[#allocation5 + $0x3c0] sm:$0xff]
    %v209 = vld [vmem:[#allocation5 + $0x3c8] sm:$0xff]
    %v210 = vld [vmem:[#allocation5 + $0x3d0] sm:$0xff]
    %v211 = vld [vmem:[#allocation5 + $0x3d8] sm:$0xff]
    %v212 = vld [vmem:[#allocation5 + $0x3e0] sm:$0xff]
    %v213 = vld [vmem:[#allocation5 + $0x3e8] sm:$0xff]
    %v214 = vld [vmem:[#allocation5 + $0x3f0] sm:$0xff]
    %v215 = vld [vmem:[#allocation5 + $0x3f8] sm:$0xff]
    %v216 = vld [vmem:[%s2] sm:$0x1]
    %v218 = vlaneseq
    %v219 = vshrl.u32 %v218, 7
    %v220 = vsub.s32 0, %v219
    %v221 = vrot.slane %v216, %v220
    %223 = vmatprep.subr.mxu0 0.0
    %224 = vmatpush1.msra.mxu0 %v88
    %225 = vmatprep.subr.mxu0 0.0
    %226 = vmatpush1.msra.mxu0 %v89
    %227 = vmatprep.subr.mxu0 0.0
    %228 = vmatpush1.msra.mxu0 %v90
    %229 = vmatprep.subr.mxu0 0.0
    %230 = vmatpush1.msra.mxu0 %v91
    %231 = vmatprep.subr.mxu0 0.0
    %232 = vmatpush1.msra.mxu0 %v92
    %233 = vmatprep.subr.mxu0 0.0
    %234 = vmatpush1.msra.mxu0 %v93
    %235 = vmatprep.subr.mxu0 0.0
    %236 = vmatpush1.msra.mxu0 %v94
    %237 = vmatprep.subr.mxu0 0.0
    %238 = vmatpush1.msra.mxu0 %v95
    %239 = vmatprep.subr.mxu0 0.0
    %240 = vmatpush1.msra.mxu0 %v96
    %241 = vmatprep.subr.mxu0 0.0
    %242 = vmatpush1.msra.mxu0 %v97
    %243 = vmatprep.subr.mxu0 0.0
    %244 = vmatpush1.msra.mxu0 %v98
    %245 = vmatprep.subr.mxu0 0.0
    %246 = vmatpush1.msra.mxu0 %v99
    %247 = vmatprep.subr.mxu0 0.0
    %248 = vmatpush1.msra.mxu0 %v100
    %249 = vmatprep.subr.mxu0 0.0
    %250 = vmatpush1.msra.mxu0 %v101
    %251 = vmatprep.subr.mxu0 0.0
    %252 = vmatpush1.msra.mxu0 %v102
    %253 = vmatprep.subr.mxu0 0.0
    %254 = vmatpush1.msra.mxu0 %v103
    %255 = vmatprep.subr.mxu0 0.0
    %256 = vmatpush1.msra.mxu0 %v104
    %257 = vmatprep.subr.mxu0 0.0
    %258 = vmatpush1.msra.mxu0 %v105
    %259 = vmatprep.subr.mxu0 0.0
    %260 = vmatpush1.msra.mxu0 %v106
    %261 = vmatprep.subr.mxu0 0.0
    %262 = vmatpush1.msra.mxu0 %v107
    %263 = vmatprep.subr.mxu0 0.0
    %264 = vmatpush1.msra.mxu0 %v108
    %265 = vmatprep.subr.mxu0 0.0
    %266 = vmatpush1.msra.mxu0 %v109
    %267 = vmatprep.subr.mxu0 0.0
    %268 = vmatpush1.msra.mxu0 %v110
    %269 = vmatprep.subr.mxu0 0.0
    %270 = vmatpush1.msra.mxu0 %v111
    %271 = vmatprep.subr.mxu0 0.0
    %272 = vmatpush1.msra.mxu0 %v112
    %273 = vmatprep.subr.mxu0 0.0
    %274 = vmatpush1.msra.mxu0 %v113
    %275 = vmatprep.subr.mxu0 0.0
    %276 = vmatpush1.msra.mxu0 %v114
    %277 = vmatprep.subr.mxu0 0.0
    %278 = vmatpush1.msra.mxu0 %v115
    %279 = vmatprep.subr.mxu0 0.0
    %280 = vmatpush1.msra.mxu0 %v116
    %281 = vmatprep.subr.mxu0 0.0
    %282 = vmatpush1.msra.mxu0 %v117
    %283 = vmatprep.subr.mxu0 0.0
    %284 = vmatpush1.msra.mxu0 %v118
    %285 = vmatprep.subr.mxu0 0.0
    %286 = vmatpush1.msra.mxu0 %v119
    %287 = vmatprep.mubr.f32.mxu0 %v81
    %288 = vmatmul.mubr.f32.gmra.mrb[0].mxu0 %v80
    %v289 = vpop.f32.mrb[0].mxu0
    %v290 = vadd.f32 %v221, %v289
    %v291 = vpop.f32.mrb[0].mxu0
    %292 = vdwg.mxu0
    %293 = vmatprep.subr.mxu0 0.0
    %294 = vmatpush1.msra.mxu0 %v120
    %295 = vmatprep.subr.mxu0 0.0
    %296 = vmatpush1.msra.mxu0 %v121
    %297 = vmatprep.subr.mxu0 0.0
    %298 = vmatpush1.msra.mxu0 %v122
    %299 = vmatprep.subr.mxu0 0.0
    %300 = vmatpush1.msra.mxu0 %v123
    %301 = vmatprep.subr.mxu0 0.0
    %302 = vmatpush1.msra.mxu0 %v124
    %303 = vmatprep.subr.mxu0 0.0
    %304 = vmatpush1.msra.mxu0 %v125
    %305 = vmatprep.subr.mxu0 0.0
    %306 = vmatpush1.msra.mxu0 %v126
    %307 = vmatprep.subr.mxu0 0.0
    %308 = vmatpush1.msra.mxu0 %v127
    %309 = vmatprep.subr.mxu0 0.0
    %310 = vmatpush1.msra.mxu0 %v128
    %311 = vmatprep.subr.mxu0 0.0
    %312 = vmatpush1.msra.mxu0 %v129
    %313 = vmatprep.subr.mxu0 0.0
    %314 = vmatpush1.msra.mxu0 %v130
    %315 = vmatprep.subr.mxu0 0.0
    %316 = vmatpush1.msra.mxu0 %v131
    %317 = vmatprep.subr.mxu0 0.0
    %318 = vmatpush1.msra.mxu0 %v132
    %319 = vmatprep.subr.mxu0 0.0
    %320 = vmatpush1.msra.mxu0 %v133
    %321 = vmatprep.subr.mxu0 0.0
    %322 = vmatpush1.msra.mxu0 %v134
    %323 = vmatprep.subr.mxu0 0.0
    %324 = vmatpush1.msra.mxu0 %v135
    %325 = vmatprep.subr.mxu0 0.0
    %326 = vmatpush1.msra.mxu0 %v136
    %327 = vmatprep.subr.mxu0 0.0
    %328 = vmatpush1.msra.mxu0 %v137
    %329 = vmatprep.subr.mxu0 0.0
    %330 = vmatpush1.msra.mxu0 %v138
    %331 = vmatprep.subr.mxu0 0.0
    %332 = vmatpush1.msra.mxu0 %v139
    %333 = vmatprep.subr.mxu0 0.0
    %334 = vmatpush1.msra.mxu0 %v140
    %335 = vmatprep.subr.mxu0 0.0
    %336 = vmatpush1.msra.mxu0 %v141
    %337 = vmatprep.subr.mxu0 0.0
    %338 = vmatpush1.msra.mxu0 %v142
    %339 = vmatprep.subr.mxu0 0.0
    %340 = vmatpush1.msra.mxu0 %v143
    %341 = vmatprep.subr.mxu0 0.0
    %342 = vmatpush1.msra.mxu0 %v144
    %343 = vmatprep.subr.mxu0 0.0
    %344 = vmatpush1.msra.mxu0 %v145
    %345 = vmatprep.subr.mxu0 0.0
    %346 = vmatpush1.msra.mxu0 %v146
    %347 = vmatprep.subr.mxu0 0.0
    %348 = vmatpush1.msra.mxu0 %v147
    %349 = vmatprep.subr.mxu0 0.0
    %350 = vmatpush1.msra.mxu0 %v148
    %351 = vmatprep.subr.mxu0 0.0
    %352 = vmatpush1.msra.mxu0 %v149
    %353 = vmatprep.subr.mxu0 0.0
    %354 = vmatpush1.msra.mxu0 %v150
    %355 = vmatprep.subr.mxu0 0.0
    %356 = vmatpush1.msra.mxu0 %v151
    %357 = vmatprep.mubr.f32.mxu0 %v83
    %358 = vmatmul.mubr.f32.gmra.mrb[0].mxu0 %v82
    %v359 = vpop.f32.mrb[0].mxu0
    %v360 = vadd.f32 %v290, %v359
    %v361 = vpop.f32.mrb[0].mxu0
    %362 = vdwg.mxu0
    %363 = vmatprep.subr.mxu0 0.0
    %364 = vmatpush1.msra.mxu0 %v152
    %365 = vmatprep.subr.mxu0 0.0
    %366 = vmatpush1.msra.mxu0 %v153
    %367 = vmatprep.subr.mxu0 0.0
    %368 = vmatpush1.msra.mxu0 %v154
    %369 = vmatprep.subr.mxu0 0.0
    %370 = vmatpush1.msra.mxu0 %v155
    %371 = vmatprep.subr.mxu0 0.0
    %372 = vmatpush1.msra.mxu0 %v156
    %373 = vmatprep.subr.mxu0 0.0
    %374 = vmatpush1.msra.mxu0 %v157
    %375 = vmatprep.subr.mxu0 0.0
    %376 = vmatpush1.msra.mxu0 %v158
    %377 = vmatprep.subr.mxu0 0.0
    %378 = vmatpush1.msra.mxu0 %v159
    %379 = vmatprep.subr.mxu0 0.0
    %380 = vmatpush1.msra.mxu0 %v160
    %381 = vmatprep.subr.mxu0 0.0
    %382 = vmatpush1.msra.mxu0 %v161
    %383 = vmatprep.subr.mxu0 0.0
    %384 = vmatpush1.msra.mxu0 %v162
    %385 = vmatprep.subr.mxu0 0.0
    %386 = vmatpush1.msra.mxu0 %v163
    %387 = vmatprep.subr.mxu0 0.0
    %388 = vmatpush1.msra.mxu0 %v164
    %389 = vmatprep.subr.mxu0 0.0
    %390 = vmatpush1.msra.mxu0 %v165
    %391 = vmatprep.subr.mxu0 0.0
    %392 = vmatpush1.msra.mxu0 %v166
    %393 = vmatprep.subr.mxu0 0.0
    %394 = vmatpush1.msra.mxu0 %v167
    %395 = vmatprep.subr.mxu0 0.0
    %396 = vmatpush1.msra.mxu0 %v168
    %397 = vmatprep.subr.mxu0 0.0
    %398 = vmatpush1.msra.mxu0 %v169
    %399 = vmatprep.subr.mxu0 0.0
    %400 = vmatpush1.msra.mxu0 %v170
    %401 = vmatprep.subr.mxu0 0.0
    %402 = vmatpush1.msra.mxu0 %v171
    %403 = vmatprep.subr.mxu0 0.0
    %404 = vmatpush1.msra.mxu0 %v172
    %405 = vmatprep.subr.mxu0 0.0
    %406 = vmatpush1.msra.mxu0 %v173
    %407 = vmatprep.subr.mxu0 0.0
    %408 = vmatpush1.msra.mxu0 %v174
    %409 = vmatprep.subr.mxu0 0.0
    %410 = vmatpush1.msra.mxu0 %v175
    %411 = vmatprep.subr.mxu0 0.0
    %412 = vmatpush1.msra.mxu0 %v176
    %413 = vmatprep.subr.mxu0 0.0
    %414 = vmatpush1.msra.mxu0 %v177
    %415 = vmatprep.subr.mxu0 0.0
    %416 = vmatpush1.msra.mxu0 %v178
    %417 = vmatprep.subr.mxu0 0.0
    %418 = vmatpush1.msra.mxu0 %v179
    %419 = vmatprep.subr.mxu0 0.0
    %420 = vmatpush1.msra.mxu0 %v180
    %421 = vmatprep.subr.mxu0 0.0
    %422 = vmatpush1.msra.mxu0 %v181
    %423 = vmatprep.subr.mxu0 0.0
    %424 = vmatpush1.msra.mxu0 %v182
    %425 = vmatprep.subr.mxu0 0.0
    %426 = vmatpush1.msra.mxu0 %v183
    %427 = vmatprep.mubr.f32.mxu0 %v85
    %428 = vmatmul.mubr.f32.gmra.mrb[0].mxu0 %v84
    %v429 = vpop.f32.mrb[0].mxu0
    %v430 = vadd.f32 %v360, %v429
    %v431 = vpop.f32.mrb[0].mxu0
    %432 = vdwg.mxu0
    %433 = vmatprep.subr.mxu0 0.0
    %434 = vmatpush1.msra.mxu0 %v184
    %435 = vmatprep.subr.mxu0 0.0
    %436 = vmatpush1.msra.mxu0 %v185
    %437 = vmatprep.subr.mxu0 0.0
    %438 = vmatpush1.msra.mxu0 %v186
    %439 = vmatprep.subr.mxu0 0.0
    %440 = vmatpush1.msra.mxu0 %v187
    %441 = vmatprep.subr.mxu0 0.0
    %442 = vmatpush1.msra.mxu0 %v188
    %443 = vmatprep.subr.mxu0 0.0
    %444 = vmatpush1.msra.mxu0 %v189
    %445 = vmatprep.subr.mxu0 0.0
    %446 = vmatpush1.msra.mxu0 %v190
    %447 = vmatprep.subr.mxu0 0.0
    %448 = vmatpush1.msra.mxu0 %v191
    %449 = vmatprep.subr.mxu0 0.0
    %450 = vmatpush1.msra.mxu0 %v192
    %451 = vmatprep.subr.mxu0 0.0
    %452 = vmatpush1.msra.mxu0 %v193
    %453 = vmatprep.subr.mxu0 0.0
    %454 = vmatpush1.msra.mxu0 %v194
    %455 = vmatprep.subr.mxu0 0.0
    %456 = vmatpush1.msra.mxu0 %v195
    %457 = vmatprep.subr.mxu0 0.0
    %458 = vmatpush1.msra.mxu0 %v196
    %459 = vmatprep.subr.mxu0 0.0
    %460 = vmatpush1.msra.mxu0 %v197
    %461 = vmatprep.subr.mxu0 0.0
    %462 = vmatpush1.msra.mxu0 %v198
    %463 = vmatprep.subr.mxu0 0.0
    %464 = vmatpush1.msra.mxu0 %v199
    %465 = vmatprep.subr.mxu0 0.0
    %466 = vmatpush1.msra.mxu0 %v200
    %467 = vmatprep.subr.mxu0 0.0
    %468 = vmatpush1.msra.mxu0 %v201
    %469 = vmatprep.subr.mxu0 0.0
    %470 = vmatpush1.msra.mxu0 %v202
    %471 = vmatprep.subr.mxu0 0.0
    %472 = vmatpush1.msra.mxu0 %v203
    %473 = vmatprep.subr.mxu0 0.0
    %474 = vmatpush1.msra.mxu0 %v204
    %475 = vmatprep.subr.mxu0 0.0
    %476 = vmatpush1.msra.mxu0 %v205
    %477 = vmatprep.subr.mxu0 0.0
    %478 = vmatpush1.msra.mxu0 %v206
    %479 = vmatprep.subr.mxu0 0.0
    %480 = vmatpush1.msra.mxu0 %v207
    %481 = vmatprep.subr.mxu0 0.0
    %482 = vmatpush1.msra.mxu0 %v208
    %483 = vmatprep.subr.mxu0 0.0
    %484 = vmatpush1.msra.mxu0 %v209
    %485 = vmatprep.subr.mxu0 0.0
    %486 = vmatpush1.msra.mxu0 %v210
    %487 = vmatprep.subr.mxu0 0.0
    %488 = vmatpush1.msra.mxu0 %v211
    %489 = vmatprep.subr.mxu0 0.0
    %490 = vmatpush1.msra.mxu0 %v212
    %491 = vmatprep.subr.mxu0 0.0
    %492 = vmatpush1.msra.mxu0 %v213
    %493 = vmatprep.subr.mxu0 0.0
    %494 = vmatpush1.msra.mxu0 %v214
    %495 = vmatprep.subr.mxu0 0.0
    %496 = vmatpush1.msra.mxu0 %v215
    %497 = vmatprep.mubr.f32.mxu0 %v87
    %498 = vmatmul.mubr.f32.gmra.mrb[0].mxu0 %v86
    %v499 = vpop.f32.mrb[0].mxu0
    %v500 = vadd.f32 %v430, %v499
    %v501 = vpop.f32.mrb[0].mxu0
    %502 = vdwg.mxu0
    %v503 = vmax.f32 %v500, 0.0
    %v504 = vld [vmem:[#allocation7] sm:$0xff]
    %v505 = vld [vmem:[#allocation7 + $0x8] sm:$0xff]
    %v506 = vld [vmem:[#allocation7 + $0x10] sm:$0xff]
    %v507 = vld [vmem:[#allocation7 + $0x18] sm:$0xff]
    %v508 = vld [vmem:[#allocation7 + $0x20] sm:$0xff]
    %v509 = vld [vmem:[#allocation7 + $0x28] sm:$0xff]
    %v510 = vld [vmem:[#allocation7 + $0x30] sm:$0xff]
    %v511 = vld [vmem:[#allocation7 + $0x38] sm:$0xff]
    %v512 = vld [vmem:[#allocation7 + $0x40] sm:$0xff]
    %v513 = vld [vmem:[#allocation7 + $0x48] sm:$0xff]
    %v514 = vld [vmem:[#allocation7 + $0x50] sm:$0xff]
    %v515 = vld [vmem:[#allocation7 + $0x58] sm:$0xff]
    %v516 = vld [vmem:[#allocation7 + $0x60] sm:$0xff]
    %v517 = vld [vmem:[#allocation7 + $0x68] sm:$0xff]
    %v518 = vld [vmem:[#allocation7 + $0x70] sm:$0xff]
    %v519 = vld [vmem:[#allocation7 + $0x78] sm:$0xff]
    %v520 = vld [vmem:[%s4] sm:$0x1]
    %v522 = vlaneseq
    %v523 = vshrl.u32 %v522, 7
    %v524 = vsub.s32 0, %v523
    %v525 = vrot.slane %v520, %v524
    %527 = vmatprep.subr.mxu0 0.0
    %528 = vmatpush1.msra.mxu0 %v504
    %529 = vmatprep.subr.mxu0 0.0
    %530 = vmatpush1.msra.mxu0 %v505
    %531 = vmatprep.subr.mxu0 0.0
    %532 = vmatpush1.msra.mxu0 %v506
    %533 = vmatprep.subr.mxu0 0.0
    %534 = vmatpush1.msra.mxu0 %v507
    %535 = vmatprep.subr.mxu0 0.0
    %536 = vmatpush1.msra.mxu0 %v508
    %537 = vmatprep.subr.mxu0 0.0
    %538 = vmatpush1.msra.mxu0 %v509
    %539 = vmatprep.subr.mxu0 0.0
    %540 = vmatpush1.msra.mxu0 %v510
    %541 = vmatprep.subr.mxu0 0.0
    %542 = vmatpush1.msra.mxu0 %v511
    %543 = vmatprep.subr.mxu0 0.0
    %544 = vmatpush1.msra.mxu0 %v512
    %545 = vmatprep.subr.mxu0 0.0
    %546 = vmatpush1.msra.mxu0 %v513
    %547 = vmatprep.subr.mxu0 0.0
    %548 = vmatpush1.msra.mxu0 %v514
    %549 = vmatprep.subr.mxu0 0.0
    %550 = vmatpush1.msra.mxu0 %v515
    %551 = vmatprep.subr.mxu0 0.0
    %552 = vmatpush1.msra.mxu0 %v516
    %553 = vmatprep.subr.mxu0 0.0
    %554 = vmatpush1.msra.mxu0 %v517
    %555 = vmatprep.subr.mxu0 0.0
    %556 = vmatpush1.msra.mxu0 %v518
    %557 = vmatprep.subr.mxu0 0.0
    %558 = vmatpush1.msra.mxu0 %v519
    %559 = vmatprep.subr.mxu0 0.0
    %560 = vmatpush1.msra.mxu0 0.0
    %561 = vmatprep.subr.mxu0 0.0
    %562 = vmatpush1.msra.mxu0 0.0
    %563 = vmatprep.subr.mxu0 0.0
    %564 = vmatpush1.msra.mxu0 0.0
    %565 = vmatprep.subr.mxu0 0.0
    %566 = vmatpush1.msra.mxu0 0.0
    %567 = vmatprep.subr.mxu0 0.0
    %568 = vmatpush1.msra.mxu0 0.0
    %569 = vmatprep.subr.mxu0 0.0
    %570 = vmatpush1.msra.mxu0 0.0
    %571 = vmatprep.subr.mxu0 0.0
    %572 = vmatpush1.msra.mxu0 0.0
    %573 = vmatprep.subr.mxu0 0.0
    %574 = vmatpush1.msra.mxu0 0.0
    %575 = vmatprep.subr.mxu0 0.0
    %576 = vmatpush1.msra.mxu0 0.0
    %577 = vmatprep.subr.mxu0 0.0
    %578 = vmatpush1.msra.mxu0 0.0
    %579 = vmatprep.subr.mxu0 0.0
    %580 = vmatpush1.msra.mxu0 0.0
    %581 = vmatprep.subr.mxu0 0.0
    %582 = vmatpush1.msra.mxu0 0.0
    %583 = vmatprep.subr.mxu0 0.0
    %584 = vmatpush1.msra.mxu0 0.0
    %585 = vmatprep.subr.mxu0 0.0
    %586 = vmatpush1.msra.mxu0 0.0
    %587 = vmatprep.subr.mxu0 0.0
    %588 = vmatpush1.msra.mxu0 0.0
    %589 = vmatprep.subr.mxu0 0.0
    %590 = vmatpush1.msra.mxu0 0.0
    %591 = vmatprep.mubr.f32.mxu0 0.0
    %592 = vmatmul.mubr.f32.gmra.mrb[0].mxu0 %v503
    %v593 = vpop.f32.mrb[0].mxu0
    %v594 = vadd.f32 %v525, %v593
    %v595 = vpop.f32.mrb[0].mxu0
    %596 = vdwg.mxu0
    %v597 = vmax.f32 %v594, 0.0
    %v598 = vld [vmem:[#allocation8] sm:$0xff]
    %v599 = vld [vmem:[#allocation8 + $0x8] sm:$0xff]
    %v600 = vld [vmem:[#allocation8 + $0x10] sm:$0xff]
    %v601 = vld [vmem:[#allocation8 + $0x18] sm:$0xff]
    %v602 = vld [vmem:[#allocation8 + $0x20] sm:$0xff]
    %v603 = vld [vmem:[#allocation8 + $0x28] sm:$0xff]
    %v604 = vld [vmem:[#allocation8 + $0x30] sm:$0xff]
    %v605 = vld [vmem:[#allocation8 + $0x38] sm:$0xff]
    %v606 = vld [vmem:[#allocation8 + $0x40] sm:$0xff]
    %v607 = vld [vmem:[#allocation8 + $0x48] sm:$0xff]
    %v608 = vld [vmem:[#allocation8 + $0x50] sm:$0xff]
    %v609 = vld [vmem:[#allocation8 + $0x58] sm:$0xff]
    %v610 = vld [vmem:[#allocation8 + $0x60] sm:$0xff]
    %v611 = vld [vmem:[#allocation8 + $0x68] sm:$0xff]
    %v612 = vld [vmem:[#allocation8 + $0x70] sm:$0xff]
    %v613 = vld [vmem:[#allocation8 + $0x78] sm:$0xff]
    %v614 = vld [vmem:[#allocation8 + $0x80] sm:$0xff]
    %v615 = vld [vmem:[#allocation8 + $0x88] sm:$0xff]
    %v616 = vld [vmem:[#allocation8 + $0x90] sm:$0xff]
    %v617 = vld [vmem:[#allocation8 + $0x98] sm:$0xff]
    %v618 = vld [vmem:[#allocation8 + $0xa0] sm:$0xff]
    %v619 = vld [vmem:[#allocation8 + $0xa8] sm:$0xff]
    %v620 = vld [vmem:[#allocation8 + $0xb0] sm:$0xff]
    %v621 = vld [vmem:[#allocation8 + $0xb8] sm:$0xff]
    %v622 = vld [vmem:[#allocation8 + $0xc0] sm:$0xff]
    %v623 = vld [vmem:[#allocation8 + $0xc8] sm:$0xff]
    %v624 = vld [vmem:[#allocation8 + $0xd0] sm:$0xff]
    %v625 = vld [vmem:[#allocation8 + $0xd8] sm:$0xff]
    %v626 = vld [vmem:[#allocation8 + $0xe0] sm:$0xff]
    %v627 = vld [vmem:[#allocation8 + $0xe8] sm:$0xff]
    %v628 = vld [vmem:[#allocation8 + $0xf0] sm:$0xff]
    %v629 = vld [vmem:[#allocation8 + $0xf8] sm:$0xff]
    %v630 = vld [vmem:[%s6] sm:$0x3]
    %v632 = vlaneseq
    %v633 = vshrl.u32 %v632, 7
    %v634 = vsub.s32 0, %v633
    %v635 = vrot.slane %v630, %v634
    %v636 = vlaneseq
    %v637 = vshrl.u32 %v636, 7
    %v638 = vsub.s32 1, %v637
    %v639 = vrot.slane %v630, %v638
    %642 = vmatprep.subr.mxu0 %v599
    %643 = vmatpush1.msra.mxu0 %v598
    %644 = vmatprep.subr.mxu0 %v601
    %645 = vmatpush1.msra.mxu0 %v600
    %646 = vmatprep.subr.mxu0 %v603
    %647 = vmatpush1.msra.mxu0 %v602
    %648 = vmatprep.subr.mxu0 %v605
    %649 = vmatpush1.msra.mxu0 %v604
    %650 = vmatprep.subr.mxu0 %v607
    %651 = vmatpush1.msra.mxu0 %v606
    %652 = vmatprep.subr.mxu0 %v609
    %653 = vmatpush1.msra.mxu0 %v608
    %654 = vmatprep.subr.mxu0 %v611
    %655 = vmatpush1.msra.mxu0 %v610
    %656 = vmatprep.subr.mxu0 %v613
    %657 = vmatpush1.msra.mxu0 %v612
    %658 = vmatprep.subr.mxu0 %v615
    %659 = vmatpush1.msra.mxu0 %v614
    %660 = vmatprep.subr.mxu0 %v617
    %661 = vmatpush1.msra.mxu0 %v616
    %662 = vmatprep.subr.mxu0 %v619
    %663 = vmatpush1.msra.mxu0 %v618
    %664 = vmatprep.subr.mxu0 %v621
    %665 = vmatpush1.msra.mxu0 %v620
    %666 = vmatprep.subr.mxu0 %v623
    %667 = vmatpush1.msra.mxu0 %v622
    %668 = vmatprep.subr.mxu0 %v625
    %669 = vmatpush1.msra.mxu0 %v624
    %670 = vmatprep.subr.mxu0 %v627
    %671 = vmatpush1.msra.mxu0 %v626
    %672 = vmatprep.subr.mxu0 %v629
    %673 = vmatpush1.msra.mxu0 %v628
    %674 = vmatprep.subr.mxu0 0.0
    %675 = vmatpush1.msra.mxu0 0.0
    %676 = vmatprep.subr.mxu0 0.0
    %677 = vmatpush1.msra.mxu0 0.0
    %678 = vmatprep.subr.mxu0 0.0
    %679 = vmatpush1.msra.mxu0 0.0
    %680 = vmatprep.subr.mxu0 0.0
    %681 = vmatpush1.msra.mxu0 0.0
    %682 = vmatprep.subr.mxu0 0.0
    %683 = vmatpush1.msra.mxu0 0.0
    %684 = vmatprep.subr.mxu0 0.0
    %685 = vmatpush1.msra.mxu0 0.0
    %686 = vmatprep.subr.mxu0 0.0
    %687 = vmatpush1.msra.mxu0 0.0
    %688 = vmatprep.subr.mxu0 0.0
    %689 = vmatpush1.msra.mxu0 0.0
    %690 = vmatprep.subr.mxu0 0.0
    %691 = vmatpush1.msra.mxu0 0.0
    %692 = vmatprep.subr.mxu0 0.0
    %693 = vmatpush1.msra.mxu0 0.0
    %694 = vmatprep.subr.mxu0 0.0
    %695 = vmatpush1.msra.mxu0 0.0
    %696 = vmatprep.subr.mxu0 0.0
    %697 = vmatpush1.msra.mxu0 0.0
    %698 = vmatprep.subr.mxu0 0.0
    %699 = vmatpush1.msra.mxu0 0.0
    %700 = vmatprep.subr.mxu0 0.0
    %701 = vmatpush1.msra.mxu0 0.0
    %702 = vmatprep.subr.mxu0 0.0
    %703 = vmatpush1.msra.mxu0 0.0
    %704 = vmatprep.subr.mxu0 0.0
    %705 = vmatpush1.msra.mxu0 0.0
    %706 = vmatprep.mubr.f32.mxu0 0.0
    %707 = vmatmul.mubr.f32.gmra.mrb[0].mxu0 %v597
    %v708 = vpop.f32.mrb[0].mxu0
    %v709 = vadd.f32 %v635, %v708
    %v710 = vpop.f32.mrb[0].mxu0
    %v711 = vadd.f32 %v639, %v710
    %712 = vdwg.mxu0
    %v713 = vlaneseq
    %v714 = vand.u32 %v713, 127
    %v715 = vadd.s32 %v714, 128
    %v716 = vmax.f32 %v709, -20.0
    %v717 = vmax.f32 %v711, -20.0
    %v718 = vmin.f32 %v716, 2.0
    %v719 = vmin.f32 %v717, 2.0
    %vm720 = vcmp.lt.s32.totalorder %v714, 128
    %vm721 = vcmp.lt.s32.totalorder %v715, 128
    %v722 = vsel %vm720, %v709, %v718
    %v723 = vsel %vm721, %v711, %v719
    %724 = vst [vmem:[#allocation10] sm:$0xff] %v722
    %725 = vst [vmem:[#allocation10 + $0x8] sm:$0xff] %v723
    // Predicated region
    $region46: #{tpu_custom_call.1} parent=1 // pred_check
      _
    $region47: #{tpu_custom_call.1} parent=1 // pred_check_branch
      %727 = sbr.rel (0) target = $region49
    $region48: #{tpu_custom_call.1} parent=1 // pred_region
      %s729 = ssub.s32 256, 256
      %730 = vsyncadd [#allocation4], %s729
      %s732 = sshll.u32 [#allocation10], 4
      %s733 = int_to_ptr.vmem [resolvable:$true] %s732
      %735 = dma.vmem_to_hbm [thread:$0]  %s733, 256, %s7, [#allocation4]
    $region49: #{tpu_custom_call.1} parent=1 // pred_fallthru
      _
    // Predicated region
    $region50: #{tpu_custom_call.1} parent=1 // pred_check
      _
    $region51: #{tpu_custom_call.1} parent=1 // pred_check_branch
      %737 = sbr.rel (0) target = $region53
    $region52: #{tpu_custom_call.1} parent=1 // pred_region
      %738 = dma.done [#allocation4], 256
    $region53: #{tpu_custom_call.1} parent=1 // pred_fallthru
      _
    %739 = vsyncpa [#allocation3], 1
    %740 = vsyncpa [#allocation6], 1
    %741 = vsyncpa [#allocation9], 1
    %742 = vsyncpa [#allocation4], 1

</llo_original>
